<compile_context>
chip_gen: v6e
topology: v6e:2x2x1
jax: 0.10.0
libtpu: 0.0.40
codegen_flags: <defaults>
</compile_context>

<pallas_src>
import functools

import jax
import jax.numpy as jnp
from jax.experimental import pallas as pl
from jax.experimental.pallas import tpu as pltpu

LANE = 128


def _round_up(n, m):
    return ((n + m - 1) // m) * m


def _pad2(a, rows, cols):
    r, c = a.shape
    return jnp.pad(a, ((0, rows - r), (0, cols - c)))


def dense_model_kernel(x_ref, w1_ref, wh_ref, w4_ref, b123_ref, b4_ref, o_ref,
                       *, mm_dtype):
    """One batch tile of the MLP, fully in VMEM.

    x_ref   : [TB, D_IN]       input activations (true feature width, no padding)
    w1_ref  : [D_IN, H]        layer-1 weights, hidden dim padded to 128
    wh_ref  : [2, H, H]        stacked padded weights of layers 2..3
    w4_ref  : [H, OUT]         layer-4 weights (true out_dim on the lane axis)
    b123_ref: [3, H]           stacked padded biases of layers 1..3 (f32)
    b4_ref  : [1, OUT]         layer-4 bias (f32)
    o_ref   : [TB, OUT]        output tile (exact out_dim, masked vst is fine here)
    """
    x = x_ref[...].astype(mm_dtype)

    h = jnp.dot(x, w1_ref[...], preferred_element_type=jnp.float32) + b123_ref[0:1, :]
    h = jnp.maximum(h, 0.0)

    h = jnp.dot(h.astype(mm_dtype), wh_ref[0],
                preferred_element_type=jnp.float32) + b123_ref[1:2, :]
    h = jnp.maximum(h, 0.0)

    h = jnp.dot(h.astype(mm_dtype), wh_ref[1],
                preferred_element_type=jnp.float32) + b123_ref[2:3, :]
    h = jnp.maximum(h, 0.0)

    z = jnp.dot(h.astype(mm_dtype), w4_ref[...],
                preferred_element_type=jnp.float32) + b4_ref[...]

    # sigmoid(z) = 1 / (1 + exp(-z)); exp and approx reciprocal both run on the
    # otherwise-idle EUP slot (~1e-4 relative error from the approx rcp).
    o_ref[...] = pl.reciprocal(1.0 + jnp.exp(-z), approx=True).astype(o_ref.dtype)


def dense_model_forward(x, params, *, batch_tile=None, matmul_dtype=jnp.float32):
    """x: [B, input_shape] f32. params: dict w1..w4 ([in,out] layout), b1..b4 ([1,out]).

    matmul_dtype=jnp.bfloat16 cuts MXU passes ~3x (useful on v5e); accumulation stays f32.
    """
    B, d_in = x.shape
    hidden = params["w1"].shape[1]
    out_dim = params["w4"].shape[1]
    H = _round_up(hidden, LANE)

    if batch_tile is None:
        # Multiple of 8 sublanes, capped at 1024 rows (per-tile DMA is only
        # tb*(d_in+out_dim)*4 bytes, so VMEM is never the constraint) and at
        # ~B/2 so the grid has >=2 tiles whenever B allows it (v7x megacore).
        tb = min(1024, max(8, _round_up(pl.cdiv(B, 2), 8)))
    else:
        tb = batch_tile
    tb = min(tb, B)                      # block dim may equal the full array dim
    num_tiles = pl.cdiv(B, tb)           # ragged last block is masked by Pallas

    # One-time layout plumbing: coalesce the 8 tiny parameter arrays into a few
    # (8,128)-legal slabs that stay VMEM-resident across every grid step.
    wd = matmul_dtype
    w1_p = _pad2(params["w1"], d_in, H).astype(wd)                       # [d_in, H]
    wh_p = jnp.stack([_pad2(params[f"w{i}"], H, H) for i in (2, 3)]).astype(wd)
    w4_p = _pad2(params["w4"], H, out_dim).astype(wd)                    # [H, out]
    b123_p = jnp.concatenate(
        [_pad2(params[f"b{i}"], 1, H) for i in (1, 2, 3)], axis=0)       # [3, H] f32
    b4_p = params["b4"]                                                  # [1, out] f32

    kernel = functools.partial(dense_model_kernel, mm_dtype=wd)

    out = pl.pallas_call(
        kernel,
        out_shape=jax.ShapeDtypeStruct((B, out_dim), jnp.float32),
        grid=(num_tiles,),
        in_specs=[
            # TODO(synk): if profiles show exposed DMA on this small input block,
            # try pipeline_mode=pl.Buffered(3); revert if neutral.
            pl.BlockSpec((tb, d_in), lambda i: (i, 0)),        # batch-tiled, unpadded input
            pl.BlockSpec((d_in, H), lambda i: (0, 0)),         # VMEM-resident weights
            pl.BlockSpec((2, H, H), lambda i: (0, 0, 0)),
            pl.BlockSpec((H, out_dim), lambda i: (0, 0)),
            pl.BlockSpec((3, H), lambda i: (0, 0)),
            pl.BlockSpec((1, out_dim), lambda i: (0, 0)),
        ],
        out_specs=pl.BlockSpec((tb, out_dim), lambda i: (i, 0)),  # exact-width output
        compiler_params=pltpu.CompilerParams(
            dimension_semantics=("parallel",),                    # megacore on v7x
            # VMEM use is ~0.5 MiB even at tb=1024; default scoped limit is plenty.
        ),
    )(x, w1_p, wh_p, w4_p, b123_p, b4_p)

    return out


def init_params(key, input_shape, output_shape, hidden=20):
    """Deterministic init mimicking PyTorch Linear's U(-1/sqrt(fan_in), 1/sqrt(fan_in))."""
    dims = [(input_shape, hidden), (hidden, hidden), (hidden, hidden), (hidden, output_shape)]
    params = {}
    for i, (fan_in, fan_out) in enumerate(dims, start=1):
        key, kw, kb = jax.random.split(key, 3)
        bound = 1.0 / (fan_in ** 0.5)
        params[f"w{i}"] = jax.random.uniform(
            kw, (fan_in, fan_out), jnp.float32, minval=-bound, maxval=bound)
        params[f"b{i}"] = jax.random.uniform(
            kb, (1, fan_out), jnp.float32, minval=-bound, maxval=bound)
    return params


def reference_forward(x, params):
    h = jnp.maximum(x @ params["w1"] + params["b1"], 0.0)
    h = jnp.maximum(h @ params["w2"] + params["b2"], 0.0)
    h = jnp.maximum(h @ params["w3"] + params["b3"], 0.0)
    return jax.nn.sigmoid(h @ params["w4"] + params["b4"])


if __name__ == "__main__":
    key = jax.random.PRNGKey(0)
    key, kx = jax.random.split(key)

    batch = 8
    input_shape = 32
    output_shape = 4

    x = jax.random.normal(kx, (batch, input_shape), jnp.float32)
    params = init_params(key, input_shape, output_shape)
    ref = reference_forward(x, params)

    # f32 matmul path (default): matches the PyTorch module up to the approx-rcp sigmoid.
    out = jax.block_until_ready(dense_model_forward(x, params))
    assert out.shape == (batch, output_shape)
    assert jnp.allclose(out, ref, atol=5e-3, rtol=5e-3)

    # bf16 matmul path (v5e MXU relief); f32 accumulation keeps error well inside 2e-2.
    out_bf16 = jax.block_until_ready(
        dense_model_forward(x, params, matmul_dtype=jnp.bfloat16))
    assert out_bf16.shape == (batch, output_shape)
    assert jnp.allclose(out_bf16, ref, atol=2e-2, rtol=2e-2)

    print("KERNEL_OK")
</pallas_src>

<mosaic_0001>
module attributes {stable_mosaic.version = 11 : i64} {
  func.func @dense_model_kernel(%arg0: i32, %arg1: memref<8x32xf32, #tpu.memory_space<vmem>>, %arg2: memref<32x128xf32, #tpu.memory_space<vmem>>, %arg3: memref<2x128x128xf32, #tpu.memory_space<vmem>>, %arg4: memref<128x4xf32, #tpu.memory_space<vmem>>, %arg5: memref<3x128xf32, #tpu.memory_space<vmem>>, %arg6: memref<1x4xf32, #tpu.memory_space<vmem>>, %arg7: memref<8x4xf32, #tpu.memory_space<vmem>>) attributes {dimension_semantics = [#tpu.dimension_semantics<parallel>], iteration_bounds = array<i64: 1>, scalar_prefetch = 0 : i64, scratch_operands = 0 : i64, tpu.core_type = #tpu.core_type<tc>, window_params = [{transform_indices = @transform_0, window_bounds = array<i64: 8, 32>}, {pipeline_mode = #tpu.pipeline_mode<synchronous>, transform_indices = @transform_1, window_bounds = array<i64: 32, 128>}, {pipeline_mode = #tpu.pipeline_mode<synchronous>, transform_indices = @transform_2, window_bounds = array<i64: 2, 128, 128>}, {pipeline_mode = #tpu.pipeline_mode<synchronous>, transform_indices = @transform_3, window_bounds = array<i64: 128, 4>}, {pipeline_mode = #tpu.pipeline_mode<synchronous>, transform_indices = @transform_4, window_bounds = array<i64: 3, 128>}, {pipeline_mode = #tpu.pipeline_mode<synchronous>, transform_indices = @transform_5, window_bounds = array<i64: 1, 4>}, {transform_indices = @transform_6, window_bounds = array<i64: 8, 4>}]} {
    %c0 = arith.constant 0 : index
    %c0_0 = arith.constant 0 : index
    %0 = vector.load %arg1[%c0, %c0_0] : memref<8x32xf32, #tpu.memory_space<vmem>>, vector<8x32xf32>
    %c0_1 = arith.constant 0 : index
    %c0_2 = arith.constant 0 : index
    %1 = vector.load %arg2[%c0_1, %c0_2] : memref<32x128xf32, #tpu.memory_space<vmem>>, vector<32x128xf32>
    %cst = arith.constant dense<0.000000e+00> : vector<8x128xf32>
    %2 = tpu.matmul %0, %1, %cst {dimension_numbers = #tpu.dot_dimension_numbers<[1], [0], [0], [1], [0, 0, 1, 1], [], []>} : vector<8x32xf32>, vector<32x128xf32>, vector<8x128xf32> -> vector<8x128xf32>
    %c0_3 = arith.constant 0 : index
    %c0_4 = arith.constant 0 : index
    %3 = vector.load %arg5[%c0_3, %c0_4] : memref<3x128xf32, #tpu.memory_space<vmem>>, vector<1x128xf32>
    %4 = vector.broadcast %3 : vector<1x128xf32> to vector<8x128xf32>
    %5 = arith.addf %2, %4 : vector<8x128xf32>
    %cst_5 = arith.constant 0.000000e+00 : f32
    %6 = vector.broadcast %cst_5 : f32 to vector<8x128xf32>
    %7 = arith.maximumf %5, %6 : vector<8x128xf32>
    %c0_6 = arith.constant 0 : index
    %c0_7 = arith.constant 0 : index
    %c0_8 = arith.constant 0 : index
    %8 = vector.load %arg3[%c0_6, %c0_7, %c0_8] : memref<2x128x128xf32, #tpu.memory_space<vmem>>, vector<1x128x128xf32>
    %9 = vector.shape_cast %8 : vector<1x128x128xf32> to vector<128x128xf32>
    %cst_9 = arith.constant dense<0.000000e+00> : vector<8x128xf32>
    %10 = tpu.matmul %7, %9, %cst_9 {dimension_numbers = #tpu.dot_dimension_numbers<[1], [0], [0], [1], [0, 0, 1, 1], [], []>} : vector<8x128xf32>, vector<128x128xf32>, vector<8x128xf32> -> vector<8x128xf32>
    %c1 = arith.constant 1 : index
    %c0_10 = arith.constant 0 : index
    %11 = vector.load %arg5[%c1, %c0_10] : memref<3x128xf32, #tpu.memory_space<vmem>>, vector<1x128xf32>
    %12 = vector.broadcast %11 : vector<1x128xf32> to vector<8x128xf32>
    %13 = arith.addf %10, %12 : vector<8x128xf32>
    %cst_11 = arith.constant 0.000000e+00 : f32
    %14 = vector.broadcast %cst_11 : f32 to vector<8x128xf32>
    %15 = arith.maximumf %13, %14 : vector<8x128xf32>
    %c1_12 = arith.constant 1 : index
    %c0_13 = arith.constant 0 : index
    %c0_14 = arith.constant 0 : index
    %16 = vector.load %arg3[%c1_12, %c0_13, %c0_14] : memref<2x128x128xf32, #tpu.memory_space<vmem>>, vector<1x128x128xf32>
    %17 = vector.shape_cast %16 : vector<1x128x128xf32> to vector<128x128xf32>
    %cst_15 = arith.constant dense<0.000000e+00> : vector<8x128xf32>
    %18 = tpu.matmul %15, %17, %cst_15 {dimension_numbers = #tpu.dot_dimension_numbers<[1], [0], [0], [1], [0, 0, 1, 1], [], []>} : vector<8x128xf32>, vector<128x128xf32>, vector<8x128xf32> -> vector<8x128xf32>
    %c2 = arith.constant 2 : index
    %c0_16 = arith.constant 0 : index
    %19 = vector.load %arg5[%c2, %c0_16] : memref<3x128xf32, #tpu.memory_space<vmem>>, vector<1x128xf32>
    %20 = vector.broadcast %19 : vector<1x128xf32> to vector<8x128xf32>
    %21 = arith.addf %18, %20 : vector<8x128xf32>
    %cst_17 = arith.constant 0.000000e+00 : f32
    %22 = vector.broadcast %cst_17 : f32 to vector<8x128xf32>
    %23 = arith.maximumf %21, %22 : vector<8x128xf32>
    %c0_18 = arith.constant 0 : index
    %c0_19 = arith.constant 0 : index
    %24 = vector.load %arg4[%c0_18, %c0_19] : memref<128x4xf32, #tpu.memory_space<vmem>>, vector<128x4xf32>
    %cst_20 = arith.constant dense<0.000000e+00> : vector<8x4xf32>
    %25 = tpu.matmul %23, %24, %cst_20 {dimension_numbers = #tpu.dot_dimension_numbers<[1], [0], [0], [1], [0, 0, 1, 1], [], []>} : vector<8x128xf32>, vector<128x4xf32>, vector<8x4xf32> -> vector<8x4xf32>
    %c0_21 = arith.constant 0 : index
    %c0_22 = arith.constant 0 : index
    %26 = vector.load %arg6[%c0_21, %c0_22] : memref<1x4xf32, #tpu.memory_space<vmem>>, vector<1x4xf32>
    %27 = vector.broadcast %26 : vector<1x4xf32> to vector<8x4xf32>
    %28 = arith.addf %25, %27 : vector<8x4xf32>
    %cst_23 = arith.constant 0.000000e+00 : f32
    %29 = vector.broadcast %cst_23 : f32 to vector<8x4xf32>
    %30 = arith.subf %29, %28 : vector<8x4xf32>
    %31 = math.exp %30 : vector<8x4xf32>
    %cst_24 = arith.constant 1.000000e+00 : f32
    %32 = vector.broadcast %cst_24 : f32 to vector<8x4xf32>
    %33 = arith.addf %32, %31 : vector<8x4xf32>
    %34 = tpu.reciprocal %33 {approx = true} : vector<8x4xf32> -> vector<8x4xf32>
    %c0_25 = arith.constant 0 : index
    %c0_26 = arith.constant 0 : index
    %35 = vector.load %arg7[%c0_25, %c0_26] : memref<8x4xf32, #tpu.memory_space<vmem>>, vector<8x4xf32>
    tpu.vector_store %arg7[%c0_25, %c0_26], %34 {strides = array<i32>} : memref<8x4xf32, #tpu.memory_space<vmem>>, vector<8x4xf32>,
    return
  }
  func.func @transform_0(%arg0: i32) -> (i32, i32) {
    %c0_i32 = arith.constant 0 : i32
    %c0_i32_0 = arith.constant 0 : i32
    return %arg0, %c0_i32 : i32, i32
  }
  func.func @transform_1(%arg0: i32) -> (i32, i32) {
    %c0_i32 = arith.constant 0 : i32
    %c0_i32_0 = arith.constant 0 : i32
    %c0_i32_1 = arith.constant 0 : i32
    return %c0_i32, %c0_i32_0 : i32, i32
  }
  func.func @transform_2(%arg0: i32) -> (i32, i32, i32) {
    %c0_i32 = arith.constant 0 : i32
    %c0_i32_0 = arith.constant 0 : i32
    %c0_i32_1 = arith.constant 0 : i32
    %c0_i32_2 = arith.constant 0 : i32
    return %c0_i32, %c0_i32_0, %c0_i32_1 : i32, i32, i32
  }
  func.func @transform_3(%arg0: i32) -> (i32, i32) {
    %c0_i32 = arith.constant 0 : i32
    %c0_i32_0 = arith.constant 0 : i32
    %c0_i32_1 = arith.constant 0 : i32
    return %c0_i32, %c0_i32_0 : i32, i32
  }
  func.func @transform_4(%arg0: i32) -> (i32, i32) {
    %c0_i32 = arith.constant 0 : i32
    %c0_i32_0 = arith.constant 0 : i32
    %c0_i32_1 = arith.constant 0 : i32
    return %c0_i32, %c0_i32_0 : i32, i32
  }
  func.func @transform_5(%arg0: i32) -> (i32, i32) {
    %c0_i32 = arith.constant 0 : i32
    %c0_i32_0 = arith.constant 0 : i32
    %c0_i32_1 = arith.constant 0 : i32
    return %c0_i32, %c0_i32_0 : i32, i32
  }
  func.func @transform_6(%arg0: i32) -> (i32, i32) {
    %c0_i32 = arith.constant 0 : i32
    %c0_i32_0 = arith.constant 0 : i32
    return %arg0, %c0_i32 : i32, i32
  }
}

</mosaic_0001>

<llo_original>
// kernel: tpu_custom_call.1
$region0: #{tpu_custom_call.1}
  #allocation0 [shape = 'u32[]', space=smem, size = 0x4, offset = 0x4, fixed_abs, tag = 'smem constant byte address 0x4 - core index']
  #allocation1 [shape = 'u32[144,128]{1,0:T(1,128)}', space=vmem, size = 0x12000, scoped, tag = 'internal scratch']
  %s0 = inlined_call_operand.vmem [shape: f32[8,32], index: 0, kind: input, shape index: {}]
  %s1 = inlined_call_operand.vmem [shape: f32[32,128], index: 1, kind: input, shape index: {}]
  %s2 = inlined_call_operand.hbm [shape: f32[2,128,128], index: 2, kind: input, shape index: {}]
  %s3 = inlined_call_operand.vmem [shape: f32[128,4], index: 3, kind: input, shape index: {}]
  %s4 = inlined_call_operand.vmem [shape: f32[3,128], index: 4, kind: input, shape index: {}]
  %s5 = inlined_call_operand.vmem [shape: f32[1,4], index: 5, kind: input, shape index: {}]
  %s6 = inlined_call_operand.vmem [shape: f32[8,4], index: 6, kind: output, shape index: {}]
  %s7 = sld [smem:[#allocation0]]
  $region38: #{tpu_custom_call.1} parent=0
    _
  %s9 = ssub.s32 1, %s7
  %s10 = scalar_select 0, %s9, %s7
  $region1: #{tpu_custom_call.1} parent=0
    #allocation2 [shape = 'u8[131072]{0}', space=vmem, size = 0x20000, scoped, tag = 'input window, operand 2, single buffered']
    #allocation3 [shape = 's32[1]{0}', space=sflag, size = 0x4, scoped, tag = 'scoped memory for tpu_custom_call.1']
    %11 = vsyncpa [#allocation3], 0
    // Predicated region
    $region2: #{tpu_custom_call.1} parent=1 // pred_check
      _
    $region3: #{tpu_custom_call.1} parent=1 // pred_check_branch
      %13 = sbr.rel (0) target = $region5
    $region4: #{tpu_custom_call.1} parent=1 // pred_region
      _
    $region5: #{tpu_custom_call.1} parent=1 // pred_fallthru
      _
    // Predicated region
    $region6: #{tpu_custom_call.1} parent=1 // pred_check
      _
    $region7: #{tpu_custom_call.1} parent=1 // pred_check_branch
      %15 = sbr.rel (0) target = $region9
    $region8: #{tpu_custom_call.1} parent=1 // pred_region
      _
    $region9: #{tpu_custom_call.1} parent=1 // pred_fallthru
      _
    // Predicated region
    $region10: #{tpu_custom_call.1} parent=1 // pred_check
      _
    $region11: #{tpu_custom_call.1} parent=1 // pred_check_branch
      %17 = sbr.rel (0) target = $region13
    $region12: #{tpu_custom_call.1} parent=1 // pred_region
      %s19 = ssub.s32 4096, 4096
      %20 = vsyncadd [#allocation3], %s19
      %s21 = sshll.u32 [#allocation2], 4
      %s22 = int_to_ptr.vmem [resolvable:$true] %s21
      %27 = dma.hbm_to_vmem [thread:$0]  %s2, 4096, %s22, [#allocation3], 128, 128, 8
    $region13: #{tpu_custom_call.1} parent=1 // pred_fallthru
      _
    // Predicated region
    $region14: #{tpu_custom_call.1} parent=1 // pred_check
      _
    $region15: #{tpu_custom_call.1} parent=1 // pred_check_branch
      %29 = sbr.rel (0) target = $region17
    $region16: #{tpu_custom_call.1} parent=1 // pred_region
      _
    $region17: #{tpu_custom_call.1} parent=1 // pred_fallthru
      _
    // Predicated region
    $region18: #{tpu_custom_call.1} parent=1 // pred_check
      _
    $region19: #{tpu_custom_call.1} parent=1 // pred_check_branch
      %31 = sbr.rel (0) target = $region21
    $region20: #{tpu_custom_call.1} parent=1 // pred_region
      _
    $region21: #{tpu_custom_call.1} parent=1 // pred_fallthru
      _
    // Predicated region
    $region22: #{tpu_custom_call.1} parent=1 // pred_check
      _
    $region23: #{tpu_custom_call.1} parent=1 // pred_check_branch
      %33 = sbr.rel (0) target = $region25
    $region24: #{tpu_custom_call.1} parent=1 // pred_region
      _
    $region25: #{tpu_custom_call.1} parent=1 // pred_fallthru
      _
    // Predicated region
    $region26: #{tpu_custom_call.1} parent=1 // pred_check
      _
    $region27: #{tpu_custom_call.1} parent=1 // pred_check_branch
      %35 = sbr.rel (0) target = $region29
    $region28: #{tpu_custom_call.1} parent=1 // pred_region
      %36 = dma.done [#allocation3], 4096
    $region29: #{tpu_custom_call.1} parent=1 // pred_fallthru
      _
    %v37 = vld [vmem:[%s0] sm:$0xff]
    %v38 = vld [vmem:[%s1] sm:$0xff]
    %v39 = vld [vmem:[%s1 + $0x8] sm:$0xff]
    %v40 = vld [vmem:[%s1 + $0x10] sm:$0xff]
    %v41 = vld [vmem:[%s1 + $0x18] sm:$0xff]
    %v42 = vld [vmem:[%s4] sm:$0x1]
    %v43 = vlaneseq
    %v44 = vshrl.u32 %v43, 7
    %v45 = vsub.s32 0, %v44
    %v46 = vrot.slane %v42, %v45
    %vm47 = vcmask 261120
    %v49 = vsel %vm47, %v37, 0
    %51 = vmatprep.subr.mxu0 0.0
    %52 = vmatpush1.msra.mxu0 0.0
    %53 = vmatprep.subr.mxu0 0.0
    %54 = vmatpush1.msra.mxu0 0.0
    %55 = vmatprep.subr.mxu0 0.0
    %56 = vmatpush1.msra.mxu0 0.0
    %57 = vmatprep.subr.mxu0 0.0
    %58 = vmatpush1.msra.mxu0 0.0
    %59 = vmatprep.subr.mxu0 0.0
    %60 = vmatpush1.msra.mxu0 0.0
    %61 = vmatprep.subr.mxu0 0.0
    %62 = vmatpush1.msra.mxu0 0.0
    %63 = vmatprep.subr.mxu0 0.0
    %64 = vmatpush1.msra.mxu0 0.0
    %65 = vmatprep.subr.mxu0 0.0
    %66 = vmatpush1.msra.mxu0 0.0
    %67 = vmatprep.subr.mxu0 0.0
    %68 = vmatpush1.msra.mxu0 0.0
    %69 = vmatprep.subr.mxu0 0.0
    %70 = vmatpush1.msra.mxu0 0.0
    %71 = vmatprep.subr.mxu0 0.0
    %72 = vmatpush1.msra.mxu0 0.0
    %73 = vmatprep.subr.mxu0 0.0
    %74 = vmatpush1.msra.mxu0 0.0
    %75 = vmatprep.subr.mxu0 0.0
    %76 = vmatpush1.msra.mxu0 %v41
    %77 = vmatprep.subr.mxu0 0.0
    %78 = vmatpush1.msra.mxu0 %v40
    %79 = vmatprep.subr.mxu0 0.0
    %80 = vmatpush1.msra.mxu0 %v39
    %81 = vmatprep.subr.mxu0 0.0
    %82 = vmatpush1.msra.mxu0 %v38
    %83 = vmatprep.subr.mxu0 0.0
    %84 = vmatpush2.msra.mxu0 0.0
    %85 = vmatprep.subr.mxu0 0.0
    %86 = vmatpush2.msra.mxu0 0.0
    %87 = vmatprep.subr.mxu0 0.0
    %88 = vmatpush2.msra.mxu0 0.0
    %89 = vmatprep.subr.mxu0 0.0
    %90 = vmatpush2.msra.mxu0 0.0
    %91 = vmatprep.subr.mxu0 0.0
    %92 = vmatpush2.msra.mxu0 0.0
    %93 = vmatprep.subr.mxu0 0.0
    %94 = vmatpush2.msra.mxu0 0.0
    %95 = vmatprep.subr.mxu0 0.0
    %96 = vmatpush2.msra.mxu0 0.0
    %97 = vmatprep.subr.mxu0 0.0
    %98 = vmatpush2.msra.mxu0 0.0
    %99 = vmatprep.subr.mxu0 0.0
    %100 = vmatpush2.msra.mxu0 0.0
    %101 = vmatprep.subr.mxu0 0.0
    %102 = vmatpush2.msra.mxu0 0.0
    %103 = vmatprep.subr.mxu0 0.0
    %104 = vmatpush2.msra.mxu0 0.0
    %105 = vmatprep.subr.mxu0 0.0
    %106 = vmatpush2.msra.mxu0 0.0
    %107 = vmatprep.subr.mxu0 0.0
    %108 = vmatpush2.msra.mxu0 0.0
    %109 = vmatprep.subr.mxu0 0.0
    %110 = vmatpush2.msra.mxu0 0.0
    %111 = vmatprep.subr.mxu0 0.0
    %112 = vmatpush2.msra.mxu0 0.0
    %113 = vmatprep.subr.mxu0 0.0
    %114 = vmatpush2.msra.mxu0 0.0
    %115 = vmatprep.mubr.f32.mxu0 0.0
    %116 = vmatmul.mubr.f32.gmra.mxu0 %v49
    %v117 = vpop.f32.mrf.mxu0
    %v118 = vadd.f32 %v46, %v117
    %v119 = vpop.f32.mrf.mxu0
    %120 = vdwg.mxu0
    %v121 = vmax.f32 %v118, 0.0
    %v122 = vld [vmem:[#allocation2] sm:$0xff]
    %v123 = vld [vmem:[#allocation2 + $0x8] sm:$0xff]
    %v124 = vld [vmem:[#allocation2 + $0x10] sm:$0xff]
    %v125 = vld [vmem:[#allocation2 + $0x18] sm:$0xff]
    %v126 = vld [vmem:[#allocation2 + $0x20] sm:$0xff]
    %v127 = vld [vmem:[#allocation2 + $0x28] sm:$0xff]
    %v128 = vld [vmem:[#allocation2 + $0x30] sm:$0xff]
    %v129 = vld [vmem:[#allocation2 + $0x38] sm:$0xff]
    %v130 = vld [vmem:[#allocation2 + $0x40] sm:$0xff]
    %v131 = vld [vmem:[#allocation2 + $0x48] sm:$0xff]
    %v132 = vld [vmem:[#allocation2 + $0x50] sm:$0xff]
    %v133 = vld [vmem:[#allocation2 + $0x58] sm:$0xff]
    %v134 = vld [vmem:[#allocation2 + $0x60] sm:$0xff]
    %v135 = vld [vmem:[#allocation2 + $0x68] sm:$0xff]
    %v136 = vld [vmem:[#allocation2 + $0x70] sm:$0xff]
    %v137 = vld [vmem:[#allocation2 + $0x78] sm:$0xff]
    %v138 = vld [vmem:[%s4 + $0x1] sm:$0x1]
    %v139 = vlaneseq
    %v140 = vshrl.u32 %v139, 7
    %v141 = vsub.s32 0, %v140
    %v142 = vrot.slane %v138, %v141
    %143 = vmatprep.subr.mxu0 0.0
    %144 = vmatpush1.msra.mxu0 %v137
    %145 = vmatprep.subr.mxu0 0.0
    %146 = vmatpush1.msra.mxu0 %v136
    %147 = vmatprep.subr.mxu0 0.0
    %148 = vmatpush1.msra.mxu0 %v135
    %149 = vmatprep.subr.mxu0 0.0
    %150 = vmatpush1.msra.mxu0 %v134
    %151 = vmatprep.subr.mxu0 0.0
    %152 = vmatpush1.msra.mxu0 %v133
    %153 = vmatprep.subr.mxu0 0.0
    %154 = vmatpush1.msra.mxu0 %v132
    %155 = vmatprep.subr.mxu0 0.0
    %156 = vmatpush1.msra.mxu0 %v131
    %157 = vmatprep.subr.mxu0 0.0
    %158 = vmatpush1.msra.mxu0 %v130
    %159 = vmatprep.subr.mxu0 0.0
    %160 = vmatpush1.msra.mxu0 %v129
    %161 = vmatprep.subr.mxu0 0.0
    %162 = vmatpush1.msra.mxu0 %v128
    %163 = vmatprep.subr.mxu0 0.0
    %164 = vmatpush1.msra.mxu0 %v127
    %165 = vmatprep.subr.mxu0 0.0
    %166 = vmatpush1.msra.mxu0 %v126
    %167 = vmatprep.subr.mxu0 0.0
    %168 = vmatpush1.msra.mxu0 %v125
    %169 = vmatprep.subr.mxu0 0.0
    %170 = vmatpush1.msra.mxu0 %v124
    %171 = vmatprep.subr.mxu0 0.0
    %172 = vmatpush1.msra.mxu0 %v123
    %173 = vmatprep.subr.mxu0 0.0
    %174 = vmatpush1.msra.mxu0 %v122
    %175 = vmatprep.subr.mxu0 0.0
    %176 = vmatpush2.msra.mxu0 0.0
    %177 = vmatprep.subr.mxu0 0.0
    %178 = vmatpush2.msra.mxu0 0.0
    %179 = vmatprep.subr.mxu0 0.0
    %180 = vmatpush2.msra.mxu0 0.0
    %181 = vmatprep.subr.mxu0 0.0
    %182 = vmatpush2.msra.mxu0 0.0
    %183 = vmatprep.subr.mxu0 0.0
    %184 = vmatpush2.msra.mxu0 0.0
    %185 = vmatprep.subr.mxu0 0.0
    %186 = vmatpush2.msra.mxu0 0.0
    %187 = vmatprep.subr.mxu0 0.0
    %188 = vmatpush2.msra.mxu0 0.0
    %189 = vmatprep.subr.mxu0 0.0
    %190 = vmatpush2.msra.mxu0 0.0
    %191 = vmatprep.subr.mxu0 0.0
    %192 = vmatpush2.msra.mxu0 0.0
    %193 = vmatprep.subr.mxu0 0.0
    %194 = vmatpush2.msra.mxu0 0.0
    %195 = vmatprep.subr.mxu0 0.0
    %196 = vmatpush2.msra.mxu0 0.0
    %197 = vmatprep.subr.mxu0 0.0
    %198 = vmatpush2.msra.mxu0 0.0
    %199 = vmatprep.subr.mxu0 0.0
    %200 = vmatpush2.msra.mxu0 0.0
    %201 = vmatprep.subr.mxu0 0.0
    %202 = vmatpush2.msra.mxu0 0.0
    %203 = vmatprep.subr.mxu0 0.0
    %204 = vmatpush2.msra.mxu0 0.0
    %205 = vmatprep.subr.mxu0 0.0
    %206 = vmatpush2.msra.mxu0 0.0
    %207 = vmatprep.mubr.f32.mxu0 0.0
    %208 = vmatmul.mubr.f32.gmra.mxu0 %v121
    %v209 = vpop.f32.mrf.mxu0
    %v210 = vadd.f32 %v142, %v209
    %v211 = vpop.f32.mrf.mxu0
    %212 = vdwg.mxu0
    %v213 = vmax.f32 %v210, 0.0
    %s214 = scalar_lea.vmem [#allocation2], 128
    %v215 = vld [vmem:[%s214] sm:$0xff]
    %v216 = vld [vmem:[%s214 + $0x8] sm:$0xff]
    %v217 = vld [vmem:[%s214 + $0x10] sm:$0xff]
    %v218 = vld [vmem:[%s214 + $0x18] sm:$0xff]
    %v219 = vld [vmem:[%s214 + $0x20] sm:$0xff]
    %v220 = vld [vmem:[%s214 + $0x28] sm:$0xff]
    %v221 = vld [vmem:[%s214 + $0x30] sm:$0xff]
    %v222 = vld [vmem:[%s214 + $0x38] sm:$0xff]
    %v223 = vld [vmem:[%s214 + $0x40] sm:$0xff]
    %v224 = vld [vmem:[%s214 + $0x48] sm:$0xff]
    %v225 = vld [vmem:[%s214 + $0x50] sm:$0xff]
    %v226 = vld [vmem:[%s214 + $0x58] sm:$0xff]
    %v227 = vld [vmem:[%s214 + $0x60] sm:$0xff]
    %v228 = vld [vmem:[%s214 + $0x68] sm:$0xff]
    %v229 = vld [vmem:[%s214 + $0x70] sm:$0xff]
    %v230 = vld [vmem:[%s214 + $0x78] sm:$0xff]
    %v231 = vld [vmem:[%s4 + $0x2] sm:$0x1]
    %v232 = vlaneseq
    %v233 = vshrl.u32 %v232, 7
    %v234 = vsub.s32 0, %v233
    %v235 = vrot.slane %v231, %v234
    %236 = vmatprep.subr.mxu0 0.0
    %237 = vmatpush1.msra.mxu0 %v230
    %238 = vmatprep.subr.mxu0 0.0
    %239 = vmatpush1.msra.mxu0 %v229
    %240 = vmatprep.subr.mxu0 0.0
    %241 = vmatpush1.msra.mxu0 %v228
    %242 = vmatprep.subr.mxu0 0.0
    %243 = vmatpush1.msra.mxu0 %v227
    %244 = vmatprep.subr.mxu0 0.0
    %245 = vmatpush1.msra.mxu0 %v226
    %246 = vmatprep.subr.mxu0 0.0
    %247 = vmatpush1.msra.mxu0 %v225
    %248 = vmatprep.subr.mxu0 0.0
    %249 = vmatpush1.msra.mxu0 %v224
    %250 = vmatprep.subr.mxu0 0.0
    %251 = vmatpush1.msra.mxu0 %v223
    %252 = vmatprep.subr.mxu0 0.0
    %253 = vmatpush1.msra.mxu0 %v222
    %254 = vmatprep.subr.mxu0 0.0
    %255 = vmatpush1.msra.mxu0 %v221
    %256 = vmatprep.subr.mxu0 0.0
    %257 = vmatpush1.msra.mxu0 %v220
    %258 = vmatprep.subr.mxu0 0.0
    %259 = vmatpush1.msra.mxu0 %v219
    %260 = vmatprep.subr.mxu0 0.0
    %261 = vmatpush1.msra.mxu0 %v218
    %262 = vmatprep.subr.mxu0 0.0
    %263 = vmatpush1.msra.mxu0 %v217
    %264 = vmatprep.subr.mxu0 0.0
    %265 = vmatpush1.msra.mxu0 %v216
    %266 = vmatprep.subr.mxu0 0.0
    %267 = vmatpush1.msra.mxu0 %v215
    %268 = vmatprep.subr.mxu0 0.0
    %269 = vmatpush2.msra.mxu0 0.0
    %270 = vmatprep.subr.mxu0 0.0
    %271 = vmatpush2.msra.mxu0 0.0
    %272 = vmatprep.subr.mxu0 0.0
    %273 = vmatpush2.msra.mxu0 0.0
    %274 = vmatprep.subr.mxu0 0.0
    %275 = vmatpush2.msra.mxu0 0.0
    %276 = vmatprep.subr.mxu0 0.0
    %277 = vmatpush2.msra.mxu0 0.0
    %278 = vmatprep.subr.mxu0 0.0
    %279 = vmatpush2.msra.mxu0 0.0
    %280 = vmatprep.subr.mxu0 0.0
    %281 = vmatpush2.msra.mxu0 0.0
    %282 = vmatprep.subr.mxu0 0.0
    %283 = vmatpush2.msra.mxu0 0.0
    %284 = vmatprep.subr.mxu0 0.0
    %285 = vmatpush2.msra.mxu0 0.0
    %286 = vmatprep.subr.mxu0 0.0
    %287 = vmatpush2.msra.mxu0 0.0
    %288 = vmatprep.subr.mxu0 0.0
    %289 = vmatpush2.msra.mxu0 0.0
    %290 = vmatprep.subr.mxu0 0.0
    %291 = vmatpush2.msra.mxu0 0.0
    %292 = vmatprep.subr.mxu0 0.0
    %293 = vmatpush2.msra.mxu0 0.0
    %294 = vmatprep.subr.mxu0 0.0
    %295 = vmatpush2.msra.mxu0 0.0
    %296 = vmatprep.subr.mxu0 0.0
    %297 = vmatpush2.msra.mxu0 0.0
    %298 = vmatprep.subr.mxu0 0.0
    %299 = vmatpush2.msra.mxu0 0.0
    %300 = vmatprep.mubr.f32.mxu0 0.0
    %301 = vmatmul.mubr.f32.gmra.mxu0 %v213
    %v302 = vpop.f32.mrf.mxu0
    %v303 = vadd.f32 %v235, %v302
    %v304 = vpop.f32.mrf.mxu0
    %305 = vdwg.mxu0
    %v306 = vmax.f32 %v303, 0.0
    %v307 = vld [vmem:[%s3] sm:$0xff]
    %v308 = vld [vmem:[%s3 + $0x8] sm:$0xff]
    %v309 = vld [vmem:[%s3 + $0x10] sm:$0xff]
    %v310 = vld [vmem:[%s3 + $0x18] sm:$0xff]
    %v311 = vld [vmem:[%s3 + $0x20] sm:$0xff]
    %v312 = vld [vmem:[%s3 + $0x28] sm:$0xff]
    %v313 = vld [vmem:[%s3 + $0x30] sm:$0xff]
    %v314 = vld [vmem:[%s3 + $0x38] sm:$0xff]
    %v315 = vld [vmem:[%s3 + $0x40] sm:$0xff]
    %v316 = vld [vmem:[%s3 + $0x48] sm:$0xff]
    %v317 = vld [vmem:[%s3 + $0x50] sm:$0xff]
    %v318 = vld [vmem:[%s3 + $0x58] sm:$0xff]
    %v319 = vld [vmem:[%s3 + $0x60] sm:$0xff]
    %v320 = vld [vmem:[%s3 + $0x68] sm:$0xff]
    %v321 = vld [vmem:[%s3 + $0x70] sm:$0xff]
    %v322 = vld [vmem:[%s3 + $0x78] sm:$0xff]
    %v323 = vld [vmem:[%s5] sm:$0x1]
    %v325 = vlaneseq
    %v326 = vshrl.u32 %v325, 7
    %v327 = vsub.s32 0, %v326
    %v328 = vrot.slane %v323, %v327
    %330 = vmatprep.subr.mxu0 0.0
    %331 = vmatpush1.msra.mxu0 %v322
    %332 = vmatprep.subr.mxu0 0.0
    %333 = vmatpush1.msra.mxu0 %v321
    %334 = vmatprep.subr.mxu0 0.0
    %335 = vmatpush1.msra.mxu0 %v320
    %336 = vmatprep.subr.mxu0 0.0
    %337 = vmatpush1.msra.mxu0 %v319
    %338 = vmatprep.subr.mxu0 0.0
    %339 = vmatpush1.msra.mxu0 %v318
    %340 = vmatprep.subr.mxu0 0.0
    %341 = vmatpush1.msra.mxu0 %v317
    %342 = vmatprep.subr.mxu0 0.0
    %343 = vmatpush1.msra.mxu0 %v316
    %344 = vmatprep.subr.mxu0 0.0
    %345 = vmatpush1.msra.mxu0 %v315
    %346 = vmatprep.subr.mxu0 0.0
    %347 = vmatpush1.msra.mxu0 %v314
    %348 = vmatprep.subr.mxu0 0.0
    %349 = vmatpush1.msra.mxu0 %v313
    %350 = vmatprep.subr.mxu0 0.0
    %351 = vmatpush1.msra.mxu0 %v312
    %352 = vmatprep.subr.mxu0 0.0
    %353 = vmatpush1.msra.mxu0 %v311
    %354 = vmatprep.subr.mxu0 0.0
    %355 = vmatpush1.msra.mxu0 %v310
    %356 = vmatprep.subr.mxu0 0.0
    %357 = vmatpush1.msra.mxu0 %v309
    %358 = vmatprep.subr.mxu0 0.0
    %359 = vmatpush1.msra.mxu0 %v308
    %360 = vmatprep.subr.mxu0 0.0
    %361 = vmatpush1.msra.mxu0 %v307
    %362 = vmatprep.subr.mxu0 0.0
    %363 = vmatpush2.msra.mxu0 0.0
    %364 = vmatprep.subr.mxu0 0.0
    %365 = vmatpush2.msra.mxu0 0.0
    %366 = vmatprep.subr.mxu0 0.0
    %367 = vmatpush2.msra.mxu0 0.0
    %368 = vmatprep.subr.mxu0 0.0
    %369 = vmatpush2.msra.mxu0 0.0
    %370 = vmatprep.subr.mxu0 0.0
    %371 = vmatpush2.msra.mxu0 0.0
    %372 = vmatprep.subr.mxu0 0.0
    %373 = vmatpush2.msra.mxu0 0.0
    %374 = vmatprep.subr.mxu0 0.0
    %375 = vmatpush2.msra.mxu0 0.0
    %376 = vmatprep.subr.mxu0 0.0
    %377 = vmatpush2.msra.mxu0 0.0
    %378 = vmatprep.subr.mxu0 0.0
    %379 = vmatpush2.msra.mxu0 0.0
    %380 = vmatprep.subr.mxu0 0.0
    %381 = vmatpush2.msra.mxu0 0.0
    %382 = vmatprep.subr.mxu0 0.0
    %383 = vmatpush2.msra.mxu0 0.0
    %384 = vmatprep.subr.mxu0 0.0
    %385 = vmatpush2.msra.mxu0 0.0
    %386 = vmatprep.subr.mxu0 0.0
    %387 = vmatpush2.msra.mxu0 0.0
    %388 = vmatprep.subr.mxu0 0.0
    %389 = vmatpush2.msra.mxu0 0.0
    %390 = vmatprep.subr.mxu0 0.0
    %391 = vmatpush2.msra.mxu0 0.0
    %392 = vmatprep.subr.mxu0 0.0
    %393 = vmatpush2.msra.mxu0 0.0
    %394 = vmatprep.mubr.f32.mxu0 0.0
    %395 = vmatmul.mubr.f32.gmra.mxu0 %v306
    %v396 = vpop.f32.mrf.mxu0
    %v397 = vadd.f32 %v328, %v396
    %v398 = vpop.f32.mrf.mxu0
    %399 = vdwg.mxu0
    %v400 = vsub.f32 0.0, %v397
    %v401 = vmul.f32 %v400, 1.442695
    %v402 = vpow.pop %v401
    %v403 = vadd.f32 %v402, 1.0
    %v404 = vrcp.pop %v403
    %vm405 = vcmask 31744
    %406 = vst.msk [vmem:[%s6] sm:$0xff] %vm405, %v404
    // Predicated region
    $region30: #{tpu_custom_call.1} parent=1 // pred_check
      _
    $region31: #{tpu_custom_call.1} parent=1 // pred_check_branch
      %408 = sbr.rel (0) target = $region33
    $region32: #{tpu_custom_call.1} parent=1 // pred_region
      _
    $region33: #{tpu_custom_call.1} parent=1 // pred_fallthru
      _
    // Predicated region
    $region34: #{tpu_custom_call.1} parent=1 // pred_check
      _
    $region35: #{tpu_custom_call.1} parent=1 // pred_check_branch
      %410 = sbr.rel (0) target = $region37
    $region36: #{tpu_custom_call.1} parent=1 // pred_region
      _
    $region37: #{tpu_custom_call.1} parent=1 // pred_fallthru
      _
    %411 = vsyncpa [#allocation3], 1

</llo_original>
